<compile_context>
chip_gen: v5e
topology: v5e:2x2
jax: 0.10.0
libtpu: 0.0.40
codegen_flags: <defaults>
</compile_context>

<pallas_src>
import functools

import jax
import jax.numpy as jnp
from jax import lax
from jax.experimental import pallas as pl
from jax.experimental.pallas import tpu as pltpu


def _sum2d(x):
    """Reduce a rank-2 array to shape (1, 1)."""
    x = jnp.sum(x, axis=1, keepdims=True)
    x = jnp.sum(x, axis=0, keepdims=True)
    return x


def _msloss_kernel(pred_ref, tgt_ref, out_ref,
                   level_acc, dh_acc, dw_acc,
                   *, lambda_reg, n_batch, H, W):
    i = pl.program_id(1)          # inner ("arbitrary") batch-reduction axis
    HW = H * W

    @pl.when(i == 0)
    def _init():
        level_acc[...] = jnp.zeros_like(level_acc)
        dh_acc[...] = jnp.zeros_like(dh_acc)
        dw_acc[...] = jnp.zeros_like(dw_acc)

    pred = pred_ref[...].astype(jnp.float32)   # (TB, C,  HW)  lane-dense
    tgt = tgt_ref[...].astype(jnp.float32)     # (TB, Ct, HW)
    TB, C, _ = pred.shape
    Ct = tgt.shape[1]

    # ---------------- level-set loss (exact f32: VPU mul + XLU lane reduce) ---------
    # sum_hw (t - pcent)^2 * p == S2 - num^2 / out_sum   per (batch, out-ch, tgt-ch).
    out_sum = jnp.sum(pred, axis=-1, keepdims=True)             # (TB, C, 1)
    lvl = jnp.zeros((TB, C, 1), jnp.float32)
    for ich in range(Ct):                                       # static; Ct is small
        t = tgt[:, ich:ich + 1, :]                              # (TB, 1, HW)
        pt = pred * t                                           # (TB, C, HW)
        num_i = jnp.sum(pt, axis=-1, keepdims=True)             # (TB, C, 1)
        s2_i = jnp.sum(pt * t, axis=-1, keepdims=True)          # (TB, C, 1)
        lvl = lvl + (s2_i - (num_i * num_i) / out_sum)
    level_acc[...] += jnp.sum(lvl, axis=0)                      # (C, 1)

    # ---------------- 2-D gradient (TV, L1) loss ------------------------------------
    # dH (row diffs, flat offset W): full-width cyclic difference via pltpu.roll.
    # sum_l |pred[(l±W)%HW] - pred[l]| is identical for either rotate direction, so no
    # mask is needed; subtract the W wrap pairs (last row vs first row) from two tiny
    # W-lane slices.
    rolled = pltpu.roll(pred, shift=W, axis=2)                                # (TB, C, HW)
    cyc = jnp.sum(jnp.abs(rolled - pred), axis=-1, keepdims=True)             # (TB, C, 1)
    wrap = jnp.sum(jnp.abs(pred[:, :, :W] - pred[:, :, (H - 1) * W:]),
                   axis=-1, keepdims=True)                                    # (TB, C, 1)
    dh_acc[...] += jnp.sum(cyc - wrap, axis=0)                                # (C, 1)

    # dW (col diffs, flat offset 1): shifted-slice difference with an in-kernel iota
    # row-wrap mask (no mask DMA input), reduced to (C, 1) immediately.
    widx = lax.broadcasted_iota(jnp.int32, (1, 1, HW - 1), 2)
    wmask = jnp.where(widx % W != W - 1, 1.0, 0.0).astype(jnp.float32)
    dw = jnp.abs(pred[:, :, 1:] - pred[:, :, :HW - 1]) * wmask                # (TB, C, HW-1)
    dw_acc[...] += jnp.sum(jnp.sum(dw, axis=-1, keepdims=True), axis=0)       # (C, 1)

    @pl.when(i == pl.num_programs(1) - 1)
    def _finalize():
        lvl_t = _sum2d(level_acc[...]) / float(n_batch * H * W)        # mean over (B,H,W)
        gh_t = _sum2d(dh_acc[...]) / float(n_batch * (H - 1) * W)      # mean over (B,H-1,W)
        gw_t = _sum2d(dw_acc[...]) / float(n_batch * H * (W - 1))      # mean over (B,H,W-1)
        out_ref[0] = lvl_t + lambda_reg * (gh_t + gw_t)                # per-slice partial


def ms_loss(prediction, target, lambda_reg):
    """Pallas implementation of MSLoss.forward(prediction, target)."""
    B, C, H, W = prediction.shape
    Bt, Ct, Ht, Wt = target.shape
    assert (B, H, W) == (Bt, Ht, Wt), "prediction/target batch+spatial must match"
    assert H >= 2 and W >= 2, "gradient loss requires H >= 2 and W >= 2"

    HW = H * W
    # Lane-dense layout: fold spatial dims in the wrapper (contiguous reshape).
    pred_flat = prediction.astype(jnp.float32).reshape(B, C, HW)
    tgt_flat = target.astype(jnp.float32).reshape(B, Ct, HW)

    # ---- generation-aware tiling ----------------------------------------------------
    try:
        vmem_cap = int(pltpu.get_tpu_info().vmem_capacity_bytes)
    except Exception:
        vmem_cap = 64 * 1024 * 1024                       # conservative (v7x per-TC)
    itemsize = pred_flat.dtype.itemsize
    per_batch_bytes = (C + Ct) * HW * itemsize
    input_block_budget = min(2 * 1024 * 1024, vmem_cap // 8)   # ~0.5-2 MiB input blocks
    tb_cap = max(1, input_block_budget // per_batch_bytes)

    n_par = 2 if B >= 2 else 1                 # leading "parallel" batch split (v7x 2 TCs)
    TB = int(max(1, min(pl.cdiv(B, n_par), tb_cap)))
    n_inner = int(pl.cdiv(B, TB * n_par))
    Bp = n_par * n_inner * TB

    # Pad batches: pred with ONES / target with ZEROS so padded batches contribute
    # exactly 0 to level (num = S2 = 0, out_sum = HW) and 0 to dH/dW (constant image).
    pad = Bp - B
    if pad:
        pred_flat = jnp.concatenate(
            [pred_flat, jnp.ones((pad, C, HW), pred_flat.dtype)], axis=0)
        tgt_flat = jnp.concatenate(
            [tgt_flat, jnp.zeros((pad, Ct, HW), tgt_flat.dtype)], axis=0)

    step_in_bytes = TB * per_batch_bytes
    vmem_limit = int(min(vmem_cap,
                         max(8 * 1024 * 1024, 4 * step_in_bytes + (2 << 20))))

    kernel = functools.partial(_msloss_kernel,
                               lambda_reg=float(lambda_reg),
                               n_batch=B, H=H, W=W)

    partials = pl.pallas_call(
        kernel,
        out_shape=jax.ShapeDtypeStruct((n_par, 1, 1), jnp.float32),
        grid_spec=pltpu.PrefetchScalarGridSpec(
            num_scalar_prefetch=0,
            grid=(n_par, n_inner),
            in_specs=[
                pl.BlockSpec((TB, C, HW), lambda p, i: (p * n_inner + i, 0, 0)),
                pl.BlockSpec((TB, Ct, HW), lambda p, i: (p * n_inner + i, 0, 0)),
            ],
            out_specs=pl.BlockSpec((1, 1, 1), lambda p, i: (p, 0, 0)),
            scratch_shapes=[
                pltpu.VMEM((C, 1), jnp.float32),   # level-set partial
                pltpu.VMEM((C, 1), jnp.float32),   # dH partial
                pltpu.VMEM((C, 1), jnp.float32),   # dW partial
            ],
        ),
        compiler_params=pltpu.CompilerParams(
            dimension_semantics=("parallel", "arbitrary"),
            vmem_limit_bytes=vmem_limit,
        ),
    )(pred_flat, tgt_flat)

    # Combine the per-TensorCore partial sums (each already divided by the global
    # denominators) into the final scalar loss.
    return jnp.sum(partials)


def _reference_msloss(pred, tgt, lam):
    """Pure-JAX reference matching the PyTorch MSLoss semantics (literal form)."""
    B, C, H, W = pred.shape
    Ct = tgt.shape[1]
    out_sum = jnp.sum(pred, axis=(2, 3))                     # (B, C)
    level = jnp.zeros((B, H, W), jnp.float32)
    for ich in range(Ct):
        t = tgt[:, ich:ich + 1]                              # (B, 1, H, W)
        num = jnp.sum(t * pred, axis=(2, 3))                 # (B, C)
        pc = (num / out_sum)[:, :, None, None]               # (B, C, 1, 1)
        plevel = t - pc                                      # (B, C, H, W)
        level = level + jnp.sum(plevel * plevel * pred, axis=1)
    level_loss = jnp.mean(level)
    dH = jnp.abs(pred[:, :, 1:, :] - pred[:, :, :-1, :])
    dW = jnp.abs(pred[:, :, :, 1:] - pred[:, :, :, :-1])
    grad_loss = jnp.mean(jnp.sum(dH, axis=1)) + jnp.mean(jnp.sum(dW, axis=1))
    return level_loss + lam * grad_loss


if __name__ == "__main__":
    key = jax.random.PRNGKey(0)
    k1, k2 = jax.random.split(key)

    # prediction (B, C_out, H, W), target (B, C_tar, H, W)
    B, C, Ct, H, W = 2, 4, 3, 16, 16
    logits = jax.random.normal(k1, (B, C, H, W), jnp.float32)
    prediction = jax.nn.softmax(logits, axis=1)
    target = jax.random.uniform(k2, (B, Ct, H, W), dtype=jnp.float32)

    lambda_reg = 0.5  # deterministic choice for MSLoss(reg=...)

    result = jax.block_until_ready(ms_loss(prediction, target, lambda_reg))
    expected = jax.block_until_ready(_reference_msloss(prediction, target, lambda_reg))

    assert jnp.allclose(result, expected, rtol=1e-5, atol=1e-5), (result, expected)
    print("KERNEL_OK")
</pallas_src>

<mosaic_0001>
module attributes {stable_mosaic.version = 11 : i64} {
  func.func @_msloss_kernel(%arg0: i32, %arg1: i32, %arg2: memref<1x4x256xf32, #tpu.memory_space<vmem>>, %arg3: memref<1x3x256xf32, #tpu.memory_space<vmem>>, %arg4: memref<1x1x1xf32, #tpu.memory_space<vmem>>, %arg5: memref<4x1xf32, #tpu.memory_space<vmem>>, %arg6: memref<4x1xf32, #tpu.memory_space<vmem>>, %arg7: memref<4x1xf32, #tpu.memory_space<vmem>>) attributes {dimension_semantics = [#tpu.dimension_semantics<parallel>, #tpu.dimension_semantics<arbitrary>], iteration_bounds = array<i64: 2, 1>, scalar_prefetch = 0 : i64, scratch_operands = 3 : i64, tpu.core_type = #tpu.core_type<tc>, window_params = [{transform_indices = @transform_0, window_bounds = array<i64: 1, 4, 256>}, {transform_indices = @transform_1, window_bounds = array<i64: 1, 3, 256>}, {transform_indices = @transform_2, window_bounds = array<i64: 1, 1, 1>}]} {
    %c0_i32 = arith.constant 0 : i32
    %0 = arith.cmpi eq, %arg1, %c0_i32 : i32
    %1 = arith.extui %0 : i1 to i32
    %c0_i32_0 = arith.constant 0 : i32
    %2 = arith.cmpi ne, %1, %c0_i32_0 : i32
    scf.if %2 {
      %cst_40 = arith.constant 0.000000e+00 : f32
      %104 = vector.broadcast %cst_40 : f32 to vector<4x1xf32>
      %c0_41 = arith.constant 0 : index
      %c0_42 = arith.constant 0 : index
      %105 = vector.load %arg5[%c0_41, %c0_42] : memref<4x1xf32, #tpu.memory_space<vmem>>, vector<4x1xf32>
      tpu.vector_store %arg5[%c0_41, %c0_42], %104 {strides = array<i32>} : memref<4x1xf32, #tpu.memory_space<vmem>>, vector<4x1xf32>,
      %cst_43 = arith.constant 0.000000e+00 : f32
      %106 = vector.broadcast %cst_43 : f32 to vector<4x1xf32>
      %c0_44 = arith.constant 0 : index
      %c0_45 = arith.constant 0 : index
      %107 = vector.load %arg6[%c0_44, %c0_45] : memref<4x1xf32, #tpu.memory_space<vmem>>, vector<4x1xf32>
      tpu.vector_store %arg6[%c0_44, %c0_45], %106 {strides = array<i32>} : memref<4x1xf32, #tpu.memory_space<vmem>>, vector<4x1xf32>,
      %cst_46 = arith.constant 0.000000e+00 : f32
      %108 = vector.broadcast %cst_46 : f32 to vector<4x1xf32>
      %c0_47 = arith.constant 0 : index
      %c0_48 = arith.constant 0 : index
      %109 = vector.load %arg7[%c0_47, %c0_48] : memref<4x1xf32, #tpu.memory_space<vmem>>, vector<4x1xf32>
      tpu.vector_store %arg7[%c0_47, %c0_48], %108 {strides = array<i32>} : memref<4x1xf32, #tpu.memory_space<vmem>>, vector<4x1xf32>,
    } else {
    }
    %c0 = arith.constant 0 : index
    %c0_1 = arith.constant 0 : index
    %c0_2 = arith.constant 0 : index
    %3 = vector.load %arg2[%c0, %c0_1, %c0_2] : memref<1x4x256xf32, #tpu.memory_space<vmem>>, vector<1x4x256xf32>
    %c0_3 = arith.constant 0 : index
    %c0_4 = arith.constant 0 : index
    %c0_5 = arith.constant 0 : index
    %4 = vector.load %arg3[%c0_3, %c0_4, %c0_5] : memref<1x3x256xf32, #tpu.memory_space<vmem>>, vector<1x3x256xf32>
    %cst = arith.constant dense<0.000000e+00> : vector<1x4xf32>
    %5 = vector.multi_reduction <add>, %3, %cst [2] : vector<1x4x256xf32> to vector<1x4xf32>
    %6 = vector.shape_cast %5 : vector<1x4xf32> to vector<1x4x1xf32>
    %cst_6 = arith.constant 0.000000e+00 : f32
    %7 = vector.broadcast %cst_6 : f32 to vector<1x4x1xf32>
    %8 = vector.extract_strided_slice %4 {offsets = [0, 0, 0], sizes = [1, 1, 256], strides = [1, 1, 1]} : vector<1x3x256xf32> to vector<1x1x256xf32>
    %9 = vector.broadcast %8 : vector<1x1x256xf32> to vector<1x4x256xf32>
    %10 = arith.mulf %3, %9 : vector<1x4x256xf32>
    %cst_7 = arith.constant dense<0.000000e+00> : vector<1x4xf32>
    %11 = vector.multi_reduction <add>, %10, %cst_7 [2] : vector<1x4x256xf32> to vector<1x4xf32>
    %12 = vector.shape_cast %11 : vector<1x4xf32> to vector<1x4x1xf32>
    %13 = vector.broadcast %8 : vector<1x1x256xf32> to vector<1x4x256xf32>
    %14 = arith.mulf %10, %13 : vector<1x4x256xf32>
    %cst_8 = arith.constant dense<0.000000e+00> : vector<1x4xf32>
    %15 = vector.multi_reduction <add>, %14, %cst_8 [2] : vector<1x4x256xf32> to vector<1x4xf32>
    %16 = vector.shape_cast %15 : vector<1x4xf32> to vector<1x4x1xf32>
    %17 = arith.mulf %12, %12 : vector<1x4x1xf32>
    %18 = arith.divf %17, %6 : vector<1x4x1xf32>
    %19 = arith.subf %16, %18 : vector<1x4x1xf32>
    %20 = arith.addf %7, %19 : vector<1x4x1xf32>
    %21 = vector.extract_strided_slice %4 {offsets = [0, 1, 0], sizes = [1, 1, 256], strides = [1, 1, 1]} : vector<1x3x256xf32> to vector<1x1x256xf32>
    %22 = vector.broadcast %21 : vector<1x1x256xf32> to vector<1x4x256xf32>
    %23 = arith.mulf %3, %22 : vector<1x4x256xf32>
    %cst_9 = arith.constant dense<0.000000e+00> : vector<1x4xf32>
    %24 = vector.multi_reduction <add>, %23, %cst_9 [2] : vector<1x4x256xf32> to vector<1x4xf32>
    %25 = vector.shape_cast %24 : vector<1x4xf32> to vector<1x4x1xf32>
    %26 = vector.broadcast %21 : vector<1x1x256xf32> to vector<1x4x256xf32>
    %27 = arith.mulf %23, %26 : vector<1x4x256xf32>
    %cst_10 = arith.constant dense<0.000000e+00> : vector<1x4xf32>
    %28 = vector.multi_reduction <add>, %27, %cst_10 [2] : vector<1x4x256xf32> to vector<1x4xf32>
    %29 = vector.shape_cast %28 : vector<1x4xf32> to vector<1x4x1xf32>
    %30 = arith.mulf %25, %25 : vector<1x4x1xf32>
    %31 = arith.divf %30, %6 : vector<1x4x1xf32>
    %32 = arith.subf %29, %31 : vector<1x4x1xf32>
    %33 = arith.addf %20, %32 : vector<1x4x1xf32>
    %34 = vector.extract_strided_slice %4 {offsets = [0, 2, 0], sizes = [1, 1, 256], strides = [1, 1, 1]} : vector<1x3x256xf32> to vector<1x1x256xf32>
    %35 = vector.broadcast %34 : vector<1x1x256xf32> to vector<1x4x256xf32>
    %36 = arith.mulf %3, %35 : vector<1x4x256xf32>
    %cst_11 = arith.constant dense<0.000000e+00> : vector<1x4xf32>
    %37 = vector.multi_reduction <add>, %36, %cst_11 [2] : vector<1x4x256xf32> to vector<1x4xf32>
    %38 = vector.shape_cast %37 : vector<1x4xf32> to vector<1x4x1xf32>
    %39 = vector.broadcast %34 : vector<1x1x256xf32> to vector<1x4x256xf32>
    %40 = arith.mulf %36, %39 : vector<1x4x256xf32>
    %cst_12 = arith.constant dense<0.000000e+00> : vector<1x4xf32>
    %41 = vector.multi_reduction <add>, %40, %cst_12 [2] : vector<1x4x256xf32> to vector<1x4xf32>
    %42 = vector.shape_cast %41 : vector<1x4xf32> to vector<1x4x1xf32>
    %43 = arith.mulf %38, %38 : vector<1x4x1xf32>
    %44 = arith.divf %43, %6 : vector<1x4x1xf32>
    %45 = arith.subf %42, %44 : vector<1x4x1xf32>
    %46 = arith.addf %33, %45 : vector<1x4x1xf32>
    %c0_13 = arith.constant 0 : index
    %c0_14 = arith.constant 0 : index
    %47 = vector.load %arg5[%c0_13, %c0_14] : memref<4x1xf32, #tpu.memory_space<vmem>>, vector<4x1xf32>
    %cst_15 = arith.constant dense<0.000000e+00> : vector<4x1xf32>
    %48 = vector.multi_reduction <add>, %46, %cst_15 [0] : vector<1x4x1xf32> to vector<4x1xf32>
    %49 = arith.addf %47, %48 : vector<4x1xf32>
    %c0_16 = arith.constant 0 : index
    %c0_17 = arith.constant 0 : index
    %50 = vector.load %arg5[%c0_16, %c0_17] : memref<4x1xf32, #tpu.memory_space<vmem>>, vector<4x1xf32>
    tpu.vector_store %arg5[%c0_16, %c0_17], %49 {strides = array<i32>} : memref<4x1xf32, #tpu.memory_space<vmem>>, vector<4x1xf32>,
    %c16_i32 = arith.constant 16 : i32
    %51 = tpu.dynamic_rotate %3 by %c16_i32 dim 2 : vector<1x4x256xf32>, i32 -> vector<1x4x256xf32>
    %52 = arith.subf %51, %3 : vector<1x4x256xf32>
    %53 = math.absf %52 : vector<1x4x256xf32>
    %cst_18 = arith.constant dense<0.000000e+00> : vector<1x4xf32>
    %54 = vector.multi_reduction <add>, %53, %cst_18 [2] : vector<1x4x256xf32> to vector<1x4xf32>
    %55 = vector.shape_cast %54 : vector<1x4xf32> to vector<1x4x1xf32>
    %56 = vector.extract_strided_slice %3 {offsets = [0, 0, 0], sizes = [1, 4, 16], strides = [1, 1, 1]} : vector<1x4x256xf32> to vector<1x4x16xf32>
    %57 = vector.extract_strided_slice %3 {offsets = [0, 0, 240], sizes = [1, 4, 16], strides = [1, 1, 1]} : vector<1x4x256xf32> to vector<1x4x16xf32>
    %58 = arith.subf %56, %57 : vector<1x4x16xf32>
    %59 = math.absf %58 : vector<1x4x16xf32>
    %cst_19 = arith.constant dense<0.000000e+00> : vector<1x4xf32>
    %60 = vector.multi_reduction <add>, %59, %cst_19 [2] : vector<1x4x16xf32> to vector<1x4xf32>
    %61 = vector.shape_cast %60 : vector<1x4xf32> to vector<1x4x1xf32>
    %c0_20 = arith.constant 0 : index
    %c0_21 = arith.constant 0 : index
    %62 = vector.load %arg6[%c0_20, %c0_21] : memref<4x1xf32, #tpu.memory_space<vmem>>, vector<4x1xf32>
    %63 = arith.subf %55, %61 : vector<1x4x1xf32>
    %cst_22 = arith.constant dense<0.000000e+00> : vector<4x1xf32>
    %64 = vector.multi_reduction <add>, %63, %cst_22 [0] : vector<1x4x1xf32> to vector<4x1xf32>
    %65 = arith.addf %62, %64 : vector<4x1xf32>
    %c0_23 = arith.constant 0 : index
    %c0_24 = arith.constant 0 : index
    %66 = vector.load %arg6[%c0_23, %c0_24] : memref<4x1xf32, #tpu.memory_space<vmem>>, vector<4x1xf32>
    tpu.vector_store %arg6[%c0_23, %c0_24], %65 {strides = array<i32>} : memref<4x1xf32, #tpu.memory_space<vmem>>, vector<4x1xf32>,
    %67 = tpu.iota {dimensions = array<i32: 2>} : vector<1x1x255xi32>
    %c16_i32_25 = arith.constant 16 : i32
    %c0_i32_26 = arith.constant 0 : i32
    %68 = arith.cmpi eq, %c16_i32_25, %c0_i32_26 : i32
    %c1_i32 = arith.constant 1 : i32
    %69 = arith.select %68, %c1_i32, %c16_i32_25 : i32
    %70 = vector.broadcast %69 : i32 to vector<1x1x255xi32>
    %71 = arith.remsi %67, %70 : vector<1x1x255xi32>
    %c0_i32_27 = arith.constant 0 : i32
    %72 = vector.broadcast %c0_i32_27 : i32 to vector<1x1x255xi32>
    %73 = arith.cmpi ne, %71, %72 : vector<1x1x255xi32>
    %c0_i32_28 = arith.constant 0 : i32
    %74 = vector.broadcast %c0_i32_28 : i32 to vector<1x1x255xi32>
    %75 = arith.cmpi slt, %71, %74 : vector<1x1x255xi32>
    %c0_i32_29 = arith.constant 0 : i32
    %76 = arith.cmpi slt, %69, %c0_i32_29 : i32
    %77 = vector.broadcast %76 : i1 to vector<1x1x255xi1>
    %78 = vector.broadcast %77 : vector<1x1x255xi1> to vector<1x1x255xi1>
    %79 = arith.xori %75, %78 : vector<1x1x255xi1>
    %80 = arith.andi %79, %73 : vector<1x1x255xi1>
    %81 = vector.broadcast %69 : i32 to vector<1x1x255xi32>
    %82 = arith.addi %71, %81 : vector<1x1x255xi32>
    %83 = arith.select %80, %82, %71 : vector<1x1x255xi1>, vector<1x1x255xi32>
    %c15_i32 = arith.constant 15 : i32
    %84 = vector.broadcast %c15_i32 : i32 to vector<1x1x255xi32>
    %85 = arith.cmpi ne, %83, %84 : vector<1x1x255xi32>
    %cst_30 = arith.constant 1.000000e+00 : f32
    %cst_31 = arith.constant 0.000000e+00 : f32
    %86 = vector.broadcast %cst_30 : f32 to vector<1x1x255xf32>
    %87 = vector.broadcast %cst_31 : f32 to vector<1x1x255xf32>
    %88 = arith.select %85, %86, %87 : vector<1x1x255xi1>, vector<1x1x255xf32>
    %89 = vector.extract_strided_slice %3 {offsets = [0, 0, 1], sizes = [1, 4, 255], strides = [1, 1, 1]} : vector<1x4x256xf32> to vector<1x4x255xf32>
    %90 = vector.extract_strided_slice %3 {offsets = [0, 0, 0], sizes = [1, 4, 255], strides = [1, 1, 1]} : vector<1x4x256xf32> to vector<1x4x255xf32>
    %91 = arith.subf %89, %90 : vector<1x4x255xf32>
    %92 = math.absf %91 : vector<1x4x255xf32>
    %93 = vector.broadcast %88 : vector<1x1x255xf32> to vector<1x4x255xf32>
    %94 = arith.mulf %92, %93 : vector<1x4x255xf32>
    %c0_32 = arith.constant 0 : index
    %c0_33 = arith.constant 0 : index
    %95 = vector.load %arg7[%c0_32, %c0_33] : memref<4x1xf32, #tpu.memory_space<vmem>>, vector<4x1xf32>
    %cst_34 = arith.constant dense<0.000000e+00> : vector<1x4xf32>
    %96 = vector.multi_reduction <add>, %94, %cst_34 [2] : vector<1x4x255xf32> to vector<1x4xf32>
    %97 = vector.shape_cast %96 : vector<1x4xf32> to vector<1x4x1xf32>
    %cst_35 = arith.constant dense<0.000000e+00> : vector<4x1xf32>
    %98 = vector.multi_reduction <add>, %97, %cst_35 [0] : vector<1x4x1xf32> to vector<4x1xf32>
    %99 = arith.addf %95, %98 : vector<4x1xf32>
    %c0_36 = arith.constant 0 : index
    %c0_37 = arith.constant 0 : index
    %100 = vector.load %arg7[%c0_36, %c0_37] : memref<4x1xf32, #tpu.memory_space<vmem>>, vector<4x1xf32>
    tpu.vector_store %arg7[%c0_36, %c0_37], %99 {strides = array<i32>} : memref<4x1xf32, #tpu.memory_space<vmem>>, vector<4x1xf32>,
    %c0_i32_38 = arith.constant 0 : i32
    %101 = arith.cmpi eq, %arg1, %c0_i32_38 : i32
    %102 = arith.extui %101 : i1 to i32
    %c0_i32_39 = arith.constant 0 : i32
    %103 = arith.cmpi ne, %102, %c0_i32_39 : i32
    scf.if %103 {
      %c0_40 = arith.constant 0 : index
      %c0_41 = arith.constant 0 : index
      %104 = vector.load %arg5[%c0_40, %c0_41] : memref<4x1xf32, #tpu.memory_space<vmem>>, vector<4x1xf32>
      %cst_42 = arith.constant dense<0.000000e+00> : vector<4xf32>
      %105 = vector.multi_reduction <add>, %104, %cst_42 [1] : vector<4x1xf32> to vector<4xf32>
      %106 = vector.shape_cast %105 : vector<4xf32> to vector<4x1xf32>
      %cst_43 = arith.constant dense<0.000000e+00> : vector<1xf32>
      %107 = vector.multi_reduction <add>, %106, %cst_43 [0] : vector<4x1xf32> to vector<1xf32>
      %108 = vector.shape_cast %107 : vector<1xf32> to vector<1x1xf32>
      %cst_44 = arith.constant 5.120000e+02 : f32
      %109 = vector.broadcast %cst_44 : f32 to vector<1x1xf32>
      %110 = arith.divf %108, %109 : vector<1x1xf32>
      %c0_45 = arith.constant 0 : index
      %c0_46 = arith.constant 0 : index
      %111 = vector.load %arg6[%c0_45, %c0_46] : memref<4x1xf32, #tpu.memory_space<vmem>>, vector<4x1xf32>
      %cst_47 = arith.constant dense<0.000000e+00> : vector<4xf32>
      %112 = vector.multi_reduction <add>, %111, %cst_47 [1] : vector<4x1xf32> to vector<4xf32>
      %113 = vector.shape_cast %112 : vector<4xf32> to vector<4x1xf32>
      %cst_48 = arith.constant dense<0.000000e+00> : vector<1xf32>
      %114 = vector.multi_reduction <add>, %113, %cst_48 [0] : vector<4x1xf32> to vector<1xf32>
      %115 = vector.shape_cast %114 : vector<1xf32> to vector<1x1xf32>
      %cst_49 = arith.constant 4.800000e+02 : f32
      %116 = vector.broadcast %cst_49 : f32 to vector<1x1xf32>
      %117 = arith.divf %115, %116 : vector<1x1xf32>
      %c0_50 = arith.constant 0 : index
      %c0_51 = arith.constant 0 : index
      %118 = vector.load %arg7[%c0_50, %c0_51] : memref<4x1xf32, #tpu.memory_space<vmem>>, vector<4x1xf32>
      %cst_52 = arith.constant dense<0.000000e+00> : vector<4xf32>
      %119 = vector.multi_reduction <add>, %118, %cst_52 [1] : vector<4x1xf32> to vector<4xf32>
      %120 = vector.shape_cast %119 : vector<4xf32> to vector<4x1xf32>
      %cst_53 = arith.constant dense<0.000000e+00> : vector<1xf32>
      %121 = vector.multi_reduction <add>, %120, %cst_53 [0] : vector<4x1xf32> to vector<1xf32>
      %122 = vector.shape_cast %121 : vector<1xf32> to vector<1x1xf32>
      %cst_54 = arith.constant 4.800000e+02 : f32
      %123 = vector.broadcast %cst_54 : f32 to vector<1x1xf32>
      %124 = arith.divf %122, %123 : vector<1x1xf32>
      %125 = arith.addf %117, %124 : vector<1x1xf32>
      %cst_55 = arith.constant 5.000000e-01 : f32
      %126 = vector.broadcast %cst_55 : f32 to vector<1x1xf32>
      %127 = arith.mulf %126, %125 : vector<1x1xf32>
      %128 = arith.addf %110, %127 : vector<1x1xf32>
      %c0_56 = arith.constant 0 : index
      %c0_57 = arith.constant 0 : index
      %c0_58 = arith.constant 0 : index
      %129 = vector.load %arg4[%c0_56, %c0_57, %c0_58] : memref<1x1x1xf32, #tpu.memory_space<vmem>>, vector<1x1x1xf32>
      %130 = vector.shape_cast %129 : vector<1x1x1xf32> to vector<1x1xf32>
      %131 = vector.shape_cast %128 : vector<1x1xf32> to vector<1x1x1xf32>
      tpu.vector_store %arg4[%c0_56, %c0_57, %c0_58], %131 {strides = array<i32>} : memref<1x1x1xf32, #tpu.memory_space<vmem>>, vector<1x1x1xf32>,
    } else {
    }
    return
  }
  func.func @transform_0(%arg0: i32, %arg1: i32) -> (i32, i32, i32) {
    %c1_i32 = arith.constant 1 : i32
    %0 = arith.muli %arg0, %c1_i32 : i32
    %1 = arith.addi %0, %arg1 : i32
    %c0_i32 = arith.constant 0 : i32
    %c0_i32_0 = arith.constant 0 : i32
    %c0_i32_1 = arith.constant 0 : i32
    return %1, %c0_i32, %c0_i32_0 : i32, i32, i32
  }
  func.func @transform_1(%arg0: i32, %arg1: i32) -> (i32, i32, i32) {
    %c1_i32 = arith.constant 1 : i32
    %0 = arith.muli %arg0, %c1_i32 : i32
    %1 = arith.addi %0, %arg1 : i32
    %c0_i32 = arith.constant 0 : i32
    %c0_i32_0 = arith.constant 0 : i32
    %c0_i32_1 = arith.constant 0 : i32
    return %1, %c0_i32, %c0_i32_0 : i32, i32, i32
  }
  func.func @transform_2(%arg0: i32, %arg1: i32) -> (i32, i32, i32) {
    %c0_i32 = arith.constant 0 : i32
    %c0_i32_0 = arith.constant 0 : i32
    %c0_i32_1 = arith.constant 0 : i32
    return %arg0, %c0_i32, %c0_i32_0 : i32, i32, i32
  }
}

</mosaic_0001>

<llo_original>
// kernel: tpu_custom_call.1
$region0: #{tpu_custom_call.1}
  #allocation0 [shape = 'u32[]', space=smem, size = 0x4, offset = 0x4, fixed_abs, tag = 'smem constant byte address 0x4 - core index']
  #allocation1 [shape = 'u32[72,128]{1,0:T(1,128)}', space=vmem, size = 0x9000, scoped, tag = 'internal scratch']
  #allocation2 [shape = 'f32[4,1]{1,0:T(4,128)}', space=vmem, size = 0x800, scoped, tag = 'scratch operand']
  #allocation3 [shape = 'f32[4,1]{1,0:T(4,128)}', space=vmem, size = 0x800, scoped, tag = 'scratch operand']
  #allocation4 [shape = 'f32[4,1]{1,0:T(4,128)}', space=vmem, size = 0x800, scoped, tag = 'scratch operand']
  %s0 = inlined_call_operand.vmem [shape: f32[2,4,256], index: 0, kind: input, shape index: {}]
  %s1 = inlined_call_operand.vmem [shape: f32[2,3,256], index: 1, kind: input, shape index: {}]
  %s2 = inlined_call_operand.vmem [shape: f32[2,1,1], index: 2, kind: output, shape index: {}]
  %s3 = sld [smem:[#allocation0]]
  $region49: #{tpu_custom_call.1} parent=0
    _
  %s5 = ssub.s32 1, %s3
  %s6 = scalar_select 0, %s5, %s3
  loop: start=0, step=1, limit=4
  $region2: #{tpu_custom_call.1} parent=0 // loop_pre_header
    _
  $region3: #{tpu_custom_call.1} parent=0 // loop_header
    %s8 = sphi 0, %s12
    %p9 = scmp.ge.s32.totalorder %s8, 4
    %s15 = sphi 0, %s27
    %s16 = sphi 0, %s23
    %s17 = sphi 0, %s15
    %s18 = sphi 0, %s16
    %s19 = sphi 0, %s17
    %s20 = sphi 0, %s18
    %s32 = sphi 0, %s34
    %s35 = sphi 0, %s32
    %s36 = sphi 0, %s35
    %s52 = sphi 0, %s36
    %s60 = sphi 0, %s62
    %s63 = sphi 0, %s60
    %s64 = sphi 0, %s63
    %s80 = sphi 0, %s64
    %s86 = sphi 0, %s88
    %s89 = sphi 0, %s86
    %s90 = sphi 0, %s89
    %s106 = sphi 0, %s90
  $region4: #{tpu_custom_call.1} parent=0 // loop_header_branch
    %11 = sbr.rel (%p9) target = $region8
  $region5: #{tpu_custom_call.1} parent=0 // loop_body
    %s13 = ssub.s32 %s8, 1
    %s14 = ssub.s32 %s8, 2
    %s21 = sadd.s32 1, %s16
    %p22 = scmp.ge.s32.totalorder %s21, 1
    %s23 = scalar_select %p22, 0, %s21
    %s24 = sadd.s32 1, %s15
    %s25 = scalar_select %p22, %s24, %s15
    %p26 = scmp.ge.s32.totalorder %s25, 2
    %s27 = scalar_select %p26, 0, %s25
    %s28 = sadd.s32 %s15, %s16
    %s29 = sadd.s32 %s27, %s23
    %s30 = ssub.s32 %s28, %s29
    %p31 = scmp.eq.s32.totalorder %s30, 0
    %s33 = sadd.s32 %s32, 1
    %s34 = scalar_select %p31, %s32, %s33
    %p37 = pneg %p31
    %p38 = scmp.eq.s32.totalorder %s8, 1
    %p39 = por %p37, %p38
    %p40 = scmp.ne.s32.totalorder %s32, %s35
    %p41 = scmp.eq.s32.totalorder %s8, 0
    %p42 = por %p40, %p41
    %p43 = scmp.ne.s32.totalorder %s32, %s35
    %p44 = scmp.eq.s32.totalorder %s13, 1
    %p45 = por %p43, %p44
    %p46 = scmp.ne.s32.totalorder %s35, %s36
    %p47 = scmp.eq.s32.totalorder %s13, 0
    %p48 = por %p46, %p47
    %p49 = scmp.ne.s32.totalorder %s35, %s36
    %p50 = scmp.eq.s32.totalorder %s14, 1
    %p51 = por %p49, %p50
    %p53 = scmp.ne.s32.totalorder %s36, %s52
    %p54 = scmp.eq.s32.totalorder %s14, 0
    %p55 = por %p53, %p54
    %s56 = sadd.s32 %s15, %s16
    %s57 = sadd.s32 %s27, %s23
    %s58 = ssub.s32 %s56, %s57
    %p59 = scmp.eq.s32.totalorder %s58, 0
    %s61 = sadd.s32 %s60, 1
    %s62 = scalar_select %p59, %s60, %s61
    %p65 = pneg %p59
    %p66 = scmp.eq.s32.totalorder %s8, 1
    %p67 = por %p65, %p66
    %p68 = scmp.ne.s32.totalorder %s60, %s63
    %p69 = scmp.eq.s32.totalorder %s8, 0
    %p70 = por %p68, %p69
    %p71 = scmp.ne.s32.totalorder %s60, %s63
    %p72 = scmp.eq.s32.totalorder %s13, 1
    %p73 = por %p71, %p72
    %p74 = scmp.ne.s32.totalorder %s63, %s64
    %p75 = scmp.eq.s32.totalorder %s13, 0
    %p76 = por %p74, %p75
    %p77 = scmp.ne.s32.totalorder %s63, %s64
    %p78 = scmp.eq.s32.totalorder %s14, 1
    %p79 = por %p77, %p78
    %p81 = scmp.ne.s32.totalorder %s64, %s80
    %p82 = scmp.eq.s32.totalorder %s14, 0
    %p83 = por %p81, %p82
    %s84 = ssub.s32 %s15, %s27
    %p85 = scmp.eq.s32.totalorder %s84, 0
    %s87 = sadd.s32 %s86, 1
    %s88 = scalar_select %p85, %s86, %s87
    %p91 = pneg %p85
    %p92 = scmp.eq.s32.totalorder %s8, 1
    %p93 = por %p91, %p92
    %p94 = scmp.ne.s32.totalorder %s86, %s89
    %p95 = scmp.eq.s32.totalorder %s8, 0
    %p96 = por %p94, %p95
    %p97 = scmp.ne.s32.totalorder %s86, %s89
    %p98 = scmp.eq.s32.totalorder %s13, 1
    %p99 = por %p97, %p98
    %p100 = scmp.ne.s32.totalorder %s89, %s90
    %p101 = scmp.eq.s32.totalorder %s13, 0
    %p102 = por %p100, %p101
    %p103 = scmp.ne.s32.totalorder %s89, %s90
    %p104 = scmp.eq.s32.totalorder %s14, 1
    %p105 = por %p103, %p104
    %p107 = scmp.ne.s32.totalorder %s90, %s106
    %p108 = scmp.eq.s32.totalorder %s14, 0
    %p109 = por %p107, %p108
    %p110 = scmp.le.s32.totalorder 1, %s8
    %p111 = scmp.lt.s32.totalorder %s8, 3
    %p112 = pnand %p110, %p111
    %p113 = pneg %p112
    // Predicated region
    $region9: #{tpu_custom_call.1} parent=5 // pred_check
      _
    $region10: #{tpu_custom_call.1} parent=5 // pred_check_branch
      %115 = sbr.rel (%p112) target = $region12
    $region11: #{tpu_custom_call.1} parent=5 // pred_region
      %s116 = ssub.s32 %s8, 1
    $region12: #{tpu_custom_call.1} parent=5 // pred_fallthru
      _
    %p117 = scmp.lt.s32.totalorder %s8, 2
    // Predicated region
    $region13: #{tpu_custom_call.1} parent=5 // pred_check
      %p118 = pneg %p117
    $region14: #{tpu_custom_call.1} parent=5 // pred_check_branch
      %120 = sbr.rel (%p118) target = $region16
    $region15: #{tpu_custom_call.1} parent=5 // pred_region
      // Predicated region
      $region17: #{tpu_custom_call.1} parent=15 // pred_check
        %p121 = pneg %p42
      $region18: #{tpu_custom_call.1} parent=15 // pred_check_branch
        %123 = sbr.rel (%p121) target = $region20
      $region19: #{tpu_custom_call.1} parent=15 // pred_region
        %s124 = sadd.s32 %s15, %s16
        %p125 = scmp.lt.s32.totalorder %s124, 1
        %s126 = scalar_select %p125, %s124, 1
        %s127 = smul.addr %s126, 2
        %s128 = smul.addr %s127, 4
        %s129 = scalar_lea.vmem %s0, %s128
        %s130 = sadd.s32 %s15, %s16
      $region20: #{tpu_custom_call.1} parent=15 // pred_fallthru
        _
      // Predicated region
      $region21: #{tpu_custom_call.1} parent=15 // pred_check
        %p131 = pneg %p70
      $region22: #{tpu_custom_call.1} parent=15 // pred_check_branch
        %133 = sbr.rel (%p131) target = $region24
      $region23: #{tpu_custom_call.1} parent=15 // pred_region
        %s134 = sadd.s32 %s15, %s16
        %p135 = scmp.lt.s32.totalorder %s134, 1
        %s136 = scalar_select %p135, %s134, 1
        %s137 = smul.addr %s136, 2
        %s138 = smul.addr %s137, 4
        %s139 = scalar_lea.vmem %s1, %s138
        %s140 = sadd.s32 %s15, %s16
      $region24: #{tpu_custom_call.1} parent=15 // pred_fallthru
        _
    $region16: #{tpu_custom_call.1} parent=5 // pred_fallthru
      _
    %p141 = scmp.le.s32.totalorder 1, %s8
    %p142 = scmp.lt.s32.totalorder %s8, 3
    %p143 = pnand %p141, %p142
    %p144 = pneg %p143
    // Predicated region
    $region25: #{tpu_custom_call.1} parent=5 // pred_check
      _
    $region26: #{tpu_custom_call.1} parent=5 // pred_check_branch
      %146 = sbr.rel (%p143) target = $region28
    $region27: #{tpu_custom_call.1} parent=5 // pred_region
      %s147 = ssub.s32 %s8, 1
      %s148 = sadd.s32 %s17, %s18
      %p149 = scmp.lt.s32.totalorder %s148, 1
      %s150 = scalar_select %p149, %s148, 1
      %s151 = smul.addr %s150, 2
      %s152 = smul.addr %s151, 4
      %s153 = scalar_lea.vmem %s0, %s152
      %p154 = pneg %p48
      %p155 = pneg %p45
      %s156 = sadd.s32 %s17, %s18
      %p157 = scmp.lt.s32.totalorder %s156, 1
      %s158 = scalar_select %p157, %s156, 1
      %s159 = smul.addr %s158, 2
      %s160 = smul.addr %s159, 4
      %s161 = scalar_lea.vmem %s1, %s160
      %p162 = pneg %p76
      %p163 = pneg %p73
      %p164 = pneg %p102
      %p165 = pneg %p99
      %p166 = scmp.lt.s32.totalorder %s17, 1
      %s167 = scalar_select %p166, %s17, 1
      %s168 = scalar_lea.vmem %s2, %s167
      %s169 = sadd.s32 %s17, %s18
      %p170 = scmp.lt.s32.totalorder %s169, 1
      %s171 = scalar_select %p170, %s169, 1
      %s172 = smul.addr %s171, 2
      %s173 = smul.addr %s172, 4
      %s174 = scalar_lea.vmem %s0, %s173
      %s175 = sadd.s32 %s17, %s18
      %s176 = sadd.s32 %s17, %s18
      %p177 = scmp.lt.s32.totalorder %s176, 1
      %s178 = scalar_select %p177, %s176, 1
      %s179 = smul.addr %s178, 2
      %s180 = smul.addr %s179, 4
      %s181 = scalar_lea.vmem %s1, %s180
      %s182 = sadd.s32 %s17, %s18
      %p183 = scmp.lt.s32.totalorder %s17, 1
      %s184 = scalar_select %p183, %s17, 1
      %s185 = scalar_lea.vmem %s2, %s184
      %p186 = scmp.eq.s32.totalorder %s18, 0
      // Predicated region
      $region29: #{tpu_custom_call.1} parent=27 // pred_check
        %p187 = pneg %p186
      $region30: #{tpu_custom_call.1} parent=27 // pred_check_branch
        %189 = sbr.rel (%p187) target = $region32
      $region31: #{tpu_custom_call.1} parent=27 // pred_region
        %vm190 = vcmask 3072
        %191 = vst.msk [vmem:[#allocation2] sm:$0xf] %vm190, 0.0
        %192 = vst.msk [vmem:[#allocation3] sm:$0xf] %vm190, 0.0
        %193 = vst.msk [vmem:[#allocation4] sm:$0xf] %vm190, 0.0
      $region32: #{tpu_custom_call.1} parent=27 // pred_fallthru
        _
      %v194 = vld [vmem:[%s174] sm:$0xff]
      %v195 = vld [vmem:[%s181] sm:$0x77]
      %197 = vst [vmem:[#allocation1] ss:$2 sm:$0xff] %v194
      %v198 = vld.sshfl [vmem:[#allocation1] sm:$0xff pattern:$0x75316420]
      %v199 = vld.sshfl [vmem:[#allocation1 + $0x8] sm:$0xff pattern:$0x75316420]
      %vm202 = vcmask 1043456
      %v203 = vsel %vm202, %v198, 0.0
      %v204 = vsel %vm202, %v199, 0.0
      %v205 = vadd.f32 %v203, %v204
      %206 = vadd.xlane.f32.xlu0 %v205
      %v207 = vpop.xlane.xlu0 %206
      %v209 = vperm.slane %v195, 0
      %v210 = vperm.slane %v195, 4
      %v213 = vperm.slane %v209, 0
      %v214 = vperm.slane %v210, 0
      %v217 = vrot.slane %v214, 4
      %v218 = vsel %vm202, %v213, %v217
      %v220 = vmul.f32 %v194, %v218
      %222 = vst [vmem:[#allocation1] ss:$2 sm:$0xff] %v220
      %v223 = vld.sshfl [vmem:[#allocation1] sm:$0xff pattern:$0x75316420]
      %v224 = vld.sshfl [vmem:[#allocation1 + $0x8] sm:$0xff pattern:$0x75316420]
      %v227 = vsel %vm202, %v223, 0.0
      %v228 = vsel %vm202, %v224, 0.0
      %v229 = vadd.f32 %v227, %v228
      %230 = vadd.xlane.f32.xlu0 %v229
      %v231 = vpop.xlane.xlu0 %230
      %v232 = vmul.f32 %v220, %v218
      %234 = vst [vmem:[#allocation1] ss:$2 sm:$0xff] %v232
      %v235 = vld.sshfl [vmem:[#allocation1] sm:$0xff pattern:$0x75316420]
      %v236 = vld.sshfl [vmem:[#allocation1 + $0x8] sm:$0xff pattern:$0x75316420]
      %v239 = vsel %vm202, %v235, 0.0
      %v240 = vsel %vm202, %v236, 0.0
      %v241 = vadd.f32 %v239, %v240
      %242 = vadd.xlane.f32.xlu0 %v241
      %v243 = vpop.xlane.xlu0 %242
      %v244 = vmul.f32 %v231, %v231
      %v245 = vrcp.pop %v207
      %v246 = vmul.f32 %v207, %v245
      %v247 = vsub.f32 1.0, %v246
      %v248 = vmul.f32 %v245, %v247
      %v249 = vadd.f32 %v245, %v248
      %vm250 = vweird.f32 %v207
      %vm251 = vweird.f32 %v245
      %vm252 = vmor %vm250, %vm251
      %v253 = vsel %vm252, %v245, %v249
      %v254 = vand.u32 2147483647, %v207
      %vm255 = vcmp.eq.f32.partialorder %v254, 8.507059e+37
      %v256 = vand.u32 %v207, 2147483648
      %v257 = vor.u32 1.1754944e-38, %v256
      %v258 = vsel %vm255, %v257, %v253
      %v259 = vmul.f32 %v244, %v258
      %v260 = vsub.f32 %v243, %v259
      %v261 = vadd.f32 %v260, 0.0
      %v262 = vperm.slane %v195, 1
      %v263 = vperm.slane %v195, 5
      %v266 = vperm.slane %v262, 1
      %v267 = vperm.slane %v263, 1
      %v270 = vrot.slane %v267, 4
      %v271 = vsel %vm202, %v266, %v270
      %v273 = vmul.f32 %v194, %v271
      %275 = vst [vmem:[#allocation1] ss:$2 sm:$0xff] %v273
      %v276 = vld.sshfl [vmem:[#allocation1] sm:$0xff pattern:$0x75316420]
      %v277 = vld.sshfl [vmem:[#allocation1 + $0x8] sm:$0xff pattern:$0x75316420]
      %v280 = vsel %vm202, %v276, 0.0
      %v281 = vsel %vm202, %v277, 0.0
      %v282 = vadd.f32 %v280, %v281
      %283 = vadd.xlane.f32.xlu0 %v282
      %v284 = vpop.xlane.xlu0 %283
      %v285 = vmul.f32 %v273, %v271
      %287 = vst [vmem:[#allocation1] ss:$2 sm:$0xff] %v285
      %v288 = vld.sshfl [vmem:[#allocation1] sm:$0xff pattern:$0x75316420]
      %v289 = vld.sshfl [vmem:[#allocation1 + $0x8] sm:$0xff pattern:$0x75316420]
      %v292 = vsel %vm202, %v288, 0.0
      %v293 = vsel %vm202, %v289, 0.0
      %v294 = vadd.f32 %v292, %v293
      %295 = vadd.xlane.f32.xlu0 %v294
      %v296 = vpop.xlane.xlu0 %295
      %v297 = vmul.f32 %v284, %v284
      %v298 = vmul.f32 %v297, %v258
      %v299 = vsub.f32 %v296, %v298
      %v300 = vadd.f32 %v261, %v299
      %v301 = vperm.slane %v195, 2
      %v302 = vperm.slane %v195, 6
      %v305 = vperm.slane %v301, 2
      %v306 = vperm.slane %v302, 2
      %v309 = vrot.slane %v306, 4
      %v310 = vsel %vm202, %v305, %v309
      %v312 = vmul.f32 %v194, %v310
      %314 = vst [vmem:[#allocation1] ss:$2 sm:$0xff] %v312
      %v315 = vld.sshfl [vmem:[#allocation1] sm:$0xff pattern:$0x75316420]
      %v316 = vld.sshfl [vmem:[#allocation1 + $0x8] sm:$0xff pattern:$0x75316420]
      %v319 = vsel %vm202, %v315, 0.0
      %v320 = vsel %vm202, %v316, 0.0
      %v321 = vadd.f32 %v319, %v320
      %322 = vadd.xlane.f32.xlu0 %v321
      %v323 = vpop.xlane.xlu0 %322
      %v324 = vmul.f32 %v312, %v310
      %326 = vst [vmem:[#allocation1] ss:$2 sm:$0xff] %v324
      %v327 = vld.sshfl [vmem:[#allocation1] sm:$0xff pattern:$0x75316420]
      %v328 = vld.sshfl [vmem:[#allocation1 + $0x8] sm:$0xff pattern:$0x75316420]
      %v331 = vsel %vm202, %v327, 0.0
      %v332 = vsel %vm202, %v328, 0.0
      %v333 = vadd.f32 %v331, %v332
      %334 = vadd.xlane.f32.xlu0 %v333
      %v335 = vpop.xlane.xlu0 %334
      %v336 = vmul.f32 %v323, %v323
      %v337 = vmul.f32 %v336, %v258
      %v338 = vsub.f32 %v335, %v337
      %v339 = vadd.f32 %v300, %v338
      %v340 = vld [vmem:[#allocation2] sm:$0xf]
      %v341 = vadd.f32 %v339, 0.0
      %v342 = vadd.f32 %v340, %v341
      %vm343 = vcmask 3072
      %344 = vst.msk [vmem:[#allocation2] sm:$0xf] %vm343, %v342
      %345 = vst [vmem:[#allocation1] ss:$2 sm:$0xff] %v194
      %v346 = vld.sshfl [vmem:[#allocation1] sm:$0xff pattern:$0x75316420]
      %v347 = vld.sshfl [vmem:[#allocation1 + $0x8] sm:$0xff pattern:$0x75316420]
      %350 = vrot.lane.b32.xlu0 %v346, 16
      %v351 = vpop.permute.xlu0 %350
      %352 = vrot.lane.b32.xlu0 %v347, 16
      %v353 = vpop.permute.xlu0 %352
      %v354 = vlaneseq
      %v355 = vand.u32 %v354, 127
      %vm356 = vcmp.lt.s32.totalorder %v355, 16
      %v357 = vsel %vm356, %v351, %v353
      %v358 = vsel %vm356, %v353, %v351
      %359 = vst [vmem:[#allocation1] ss:$2 sm:$0xff] %v194
      %v360 = vld.sshfl [vmem:[#allocation1] sm:$0xff pattern:$0x75316420]
      %v361 = vld.sshfl [vmem:[#allocation1 + $0x8] sm:$0xff pattern:$0x75316420]
      %v364 = vsub.f32 %v358, %v360
      %v365 = vsub.f32 %v357, %v361
      %v366 = vand.u32 2147483647, %v364
      %v367 = vand.u32 2147483647, %v365
      %v368 = vsel %vm202, %v366, 0.0
      %v369 = vsel %vm202, %v367, 0.0
      %v370 = vadd.f32 %v368, %v369
      %371 = vadd.xlane.f32.xlu0 %v370
      %v372 = vpop.xlane.xlu0 %371
      %373 = vrot.lane.b32.xlu0 %v194, 16
      %v374 = vpop.permute.xlu0 %373
      %v375 = vrot.slane %v374, 4
      %v377 = vsub.f32 %v194, %v375
      %v378 = vand.u32 2147483647, %v377
      %vm379 = vcmask 125952
      %v380 = vsel %vm379, %v378, 0.0
      %381 = vadd.xlane.f32.xlu0 %v380
      %v382 = vpop.xlane.xlu0 %381
      %v383 = vld [vmem:[#allocation3] sm:$0xf]
      %v384 = vsub.f32 %v372, %v382
      %v385 = vadd.f32 %v384, 0.0
      %v386 = vadd.f32 %v383, %v385
      %387 = vst.msk [vmem:[#allocation3] sm:$0xf] %vm343, %v386
      %v388 = vadd.s32 %v355, 128
      %vm389 = vcmp.lt.s32.totalorder %v355, 0
      %v390 = vsub.s32 0, %v355
      %v391 = vsel %vm389, %v390, %v355
      %v392 = vshrl.u32 %v391, 4
      %v393 = vand.u32 %v391, 15
      %v394 = vsub.s32 0, %v393
      %v395 = vsel %vm389, %v394, %v393
      %vm396 = vcmp.lt.s32.totalorder %v388, 0
      %v397 = vsub.s32 0, %v388
      %v398 = vsel %vm396, %v397, %v388
      %v399 = vshrl.u32 %v398, 4
      %v400 = vand.u32 %v398, 15
      %v401 = vsub.s32 0, %v400
      %v402 = vsel %vm396, %v401, %v400
      %vm403 = vcmp.ne.s32.totalorder %v395, 0
      %vm404 = vcmp.ne.s32.totalorder %v402, 0
      %vm405 = vcmp.lt.s32.totalorder %v395, 0
      %vm406 = vcmp.lt.s32.totalorder %v402, 0
      %vm407 = vmand %vm405, %vm403
      %vm408 = vmand %vm406, %vm404
      %v409 = vadd.s32 %v395, 16
      %v410 = vadd.s32 %v402, 16
      %v411 = vsel %vm407, %v409, %v395
      %v412 = vsel %vm408, %v410, %v402
      %vm413 = vcmp.ne.s32.totalorder %v411, 15
      %vm414 = vcmp.ne.s32.totalorder %v412, 15
      %v415 = vsel %vm413, 1.0, 0.0
      %v416 = vsel %vm414, 1.0, 0.0
      %417 = vrot.lane.b32.xlu0 %v194, 1
      %v418 = vpop.permute.xlu0 %417
      %v419 = vrot.slane %v418, 4
      %vm420 = vcmask 7168
      %v421 = vsel %vm420, %v419, %v418
      %v423 = vsub.f32 %v194, %v421
      %v424 = vand.u32 2147483647, %v423
      %v427 = vrot.slane %v416, 4
      %v428 = vsel %vm202, %v415, %v427
      %429 = vrot.lane.b32.xlu0 %v428, 1
      %v430 = vpop.permute.xlu0 %429
      %v431 = vrot.slane %v430, 4
      %v432 = vsel %vm420, %v431, %v430
      %v434 = vmul.f32 %v424, %v432
      %v435 = vld [vmem:[#allocation4] sm:$0xf]
      %437 = vst [vmem:[#allocation1] ss:$2 sm:$0xff] %v434
      %v438 = vld.sshfl [vmem:[#allocation1] sm:$0xff pattern:$0x75316420]
      %v439 = vld.sshfl [vmem:[#allocation1 + $0x8] sm:$0xff pattern:$0x75316420]
      %440 = vrot.lane.b32.xlu0 %v438, 127
      %v441 = vpop.permute.xlu0 %440
      %442 = vrot.lane.b32.xlu0 %v439, 127
      %v443 = vpop.permute.xlu0 %442
      %vm444 = vcmask 1039360
      %v445 = vsel %vm444, %v441, %v443
      %v448 = vsel %vm202, %v445, 0.0
      %vm449 = vcmask 1035264
      %v450 = vsel %vm449, %v443, 0.0
      %v451 = vadd.f32 %v448, %v450
      %452 = vadd.xlane.f32.xlu0 %v451
      %v453 = vpop.xlane.xlu0 %452
      %v454 = vadd.f32 %v453, 0.0
      %v455 = vadd.f32 %v435, %v454
      %456 = vst.msk [vmem:[#allocation4] sm:$0xf] %vm343, %v455
      // Predicated region
      $region33: #{tpu_custom_call.1} parent=27 // pred_check
        %p457 = pneg %p186
      $region34: #{tpu_custom_call.1} parent=27 // pred_check_branch
        %459 = sbr.rel (%p457) target = $region36
      $region35: #{tpu_custom_call.1} parent=27 // pred_region
        %v460 = vld [vmem:[#allocation2] sm:$0xf]
        %v461 = vadd.f32 %v460, 0.0
        %v462 = vsel %vm343, %v461, 0.0
        %v463 = vrot.slane %v462, 4
        %v464 = vadd.f32 %v462, %v463
        %v465 = vrot.slane %v464, 2
        %v466 = vadd.f32 %v464, %v465
        %v467 = vrot.slane %v466, 1
        %v468 = vadd.f32 %v466, %v467
        %v469 = vrcp.pop 512.0
        %v470 = vmul.f32 512.0, %v469
        %v471 = vsub.f32 1.0, %v470
        %v472 = vmul.f32 %v469, %v471
        %v473 = vadd.f32 %v469, %v472
        %vm474 = vweird.f32 %v469
        %v475 = vsel %vm474, %v469, %v473
        %v476 = vmul.f32 %v468, %v475
        %v477 = vld [vmem:[#allocation3] sm:$0xf]
        %v478 = vadd.f32 %v477, 0.0
        %v479 = vsel %vm343, %v478, 0.0
        %v480 = vrot.slane %v479, 4
        %v481 = vadd.f32 %v479, %v480
        %v482 = vrot.slane %v481, 2
        %v483 = vadd.f32 %v481, %v482
        %v484 = vrot.slane %v483, 1
        %v485 = vadd.f32 %v483, %v484
        %v486 = vrcp.pop 480.0
        %v487 = vmul.f32 480.0, %v486
        %v488 = vsub.f32 1.0, %v487
        %v489 = vmul.f32 %v486, %v488
        %v490 = vadd.f32 %v486, %v489
        %vm491 = vweird.f32 %v486
        %v492 = vsel %vm491, %v486, %v490
        %v493 = vmul.f32 %v485, %v492
        %v494 = vld [vmem:[#allocation4] sm:$0xf]
        %v495 = vadd.f32 %v494, 0.0
        %v496 = vsel %vm343, %v495, 0.0
        %v497 = vrot.slane %v496, 4
        %v498 = vadd.f32 %v496, %v497
        %v499 = vrot.slane %v498, 2
        %v500 = vadd.f32 %v498, %v499
        %v501 = vrot.slane %v500, 1
        %v502 = vadd.f32 %v500, %v501
        %v503 = vmul.f32 %v502, %v492
        %v504 = vadd.f32 %v493, %v503
        %v505 = vmul.f32 %v504, 0.5
        %v506 = vadd.f32 %v476, %v505
        %vm507 = vcmask 0
        %508 = vst.msk [vmem:[%s185] sm:$0x1] %vm507, %v506
      $region36: #{tpu_custom_call.1} parent=27 // pred_fallthru
        _
      %p509 = scmp.lt.s32.totalorder %s17, 1
      %s510 = scalar_select %p509, %s17, 1
      %s511 = scalar_lea.vmem %s2, %s510
      // Predicated region
      $region37: #{tpu_custom_call.1} parent=27 // pred_check
        %p512 = pneg %p99
      $region38: #{tpu_custom_call.1} parent=27 // pred_check_branch
        %514 = sbr.rel (%p512) target = $region40
      $region39: #{tpu_custom_call.1} parent=27 // pred_region
        _
      $region40: #{tpu_custom_call.1} parent=27 // pred_fallthru
        _
    $region28: #{tpu_custom_call.1} parent=5 // pred_fallthru
      _
    %p515 = scmp.le.s32.totalorder 2, %s8
    // Predicated region
    $region41: #{tpu_custom_call.1} parent=5 // pred_check
      %p516 = pneg %p515
    $region42: #{tpu_custom_call.1} parent=5 // pred_check_branch
      %518 = sbr.rel (%p516) target = $region44
    $region43: #{tpu_custom_call.1} parent=5 // pred_region
      %s519 = ssub.s32 %s8, 2
      // Predicated region
      $region45: #{tpu_custom_call.1} parent=43 // pred_check
        %p520 = pneg %p105
      $region46: #{tpu_custom_call.1} parent=43 // pred_check_branch
        %522 = sbr.rel (%p520) target = $region48
      $region47: #{tpu_custom_call.1} parent=43 // pred_region
        %p523 = scmp.lt.s32.totalorder %s19, 1
        %s524 = scalar_select %p523, %s19, 1
        %s525 = scalar_lea.vmem %s2, %s524
      $region48: #{tpu_custom_call.1} parent=43 // pred_fallthru
        _
    $region44: #{tpu_custom_call.1} parent=5 // pred_fallthru
      _
  $region6: #{tpu_custom_call.1} parent=0 // loop_footer
    %s12 = sadd.s32 1, %s8
  $region7: #{tpu_custom_call.1} parent=0 // loop_footer_branch
    %7 = sbr.rel target = $region3
  $region8: #{tpu_custom_call.1} parent=0 // loop_exit
    _

</llo_original>
